<compile_context>
chip_gen: v5e
topology: v5e:2x2
jax: 0.10.0
libtpu: 0.0.40
codegen_flags: <defaults>
</compile_context>

<pallas_src>
import functools

import jax
import jax.numpy as jnp
from jax.experimental import pallas as pl
from jax.experimental.pallas import tpu as pltpu


def _round_up(x, m):
    return (x + m - 1) // m * m


# ----------------------------- fused kernel ----------------------------------


def _actor_kernel(obs_ref, w_ref, v_ref, out_ref, *, in_dim, T, EH, EA2, row_off):
    o_wt, o_w1, o_w2, o_w3 = row_off
    f32 = jnp.float32
    bf16 = jnp.bfloat16

    # --- static carve-outs from the two packed slabs (static slices) ---
    wt = w_ref[o_wt:o_wt + in_dim, 0:T]       # bf16 [in_dim, T]
    w1 = w_ref[o_w1:o_w1 + T, 0:EH]           # bf16 [T, E*H]     (lane-concat)
    w2 = w_ref[o_w2:o_w2 + EH, 0:EH]          # bf16 [E*H, E*H]   (block-diag)
    w3 = w_ref[o_w3:o_w3 + EH, 0:EA2]         # bf16 [E*H, 2*E*A] (block-diag, mean|log_std)

    trunk_b = v_ref[0:1, 0:T]                 # f32 bias / LayerNorm rows
    ln_g = v_ref[1:2, 0:T]
    ln_b = v_ref[2:3, 0:T]
    b1 = v_ref[3:4, 0:EH]
    b2 = v_ref[4:5, 0:EH]
    b3 = v_ref[5:6, 0:EA2]

    # --- trunk: Linear -> LayerNorm -> Tanh (elementwise math in f32) ---
    obs_bf = obs_ref[...].astype(bf16)
    y = jnp.dot(obs_bf, wt, preferred_element_type=f32) + trunk_b
    mu = jnp.mean(y, axis=-1, keepdims=True)
    var = jnp.mean(jnp.square(y - mu), axis=-1, keepdims=True)
    h = jnp.tanh((y - mu) * jax.lax.rsqrt(var + 1e-5) * ln_g + ln_b)

    # --- ensemble MLP heads, packed along the output-feature (lane) axis ---
    z1 = jnp.maximum(
        jnp.dot(h.astype(bf16), w1, preferred_element_type=f32) + b1, 0.0)
    z2 = jnp.maximum(
        jnp.dot(z1.astype(bf16), w2, preferred_element_type=f32) + b2, 0.0)
    o = jnp.dot(z2.astype(bf16), w3, preferred_element_type=f32) + b3

    # lanes [0, E*A) are tanh(mean), lanes [E*A, 2*E*A) are exp(log_std):
    # one select, one unmasked lane-dense store.
    lane = jax.lax.broadcasted_iota(jnp.int32, o.shape, 1)
    out_ref[...] = jnp.where(lane < (EA2 // 2), jnp.tanh(o), jnp.exp(o))


# ----------------------------- weight packing ---------------------------------


def pack_actor_params(params, *, ensemble_size, action_dim):
    """One-time weight re-layout into two contiguous slabs (load-time cost)."""
    E, A = ensemble_size, action_dim
    trunk_w = params["trunk_w"]
    in_dim, T = trunk_w.shape
    H = params["w1"].shape[2]
    EH, EA = E * H, E * A
    EA2 = 2 * EA

    # Guard (perf review): block-diagonal w2 is (E*H)^2 elements — keep well
    # under VMEM (v7x has only 64 MiB / TC).  At larger E*H use per-member
    # batched matmuls (einsum 'beh,ehk->bek') instead of block-diag packing.
    assert 2 * EH * EH <= 8 * 2 ** 20, \
        "block-diagonal packing would bloat VMEM; switch to per-member matmuls"

    W = max(T, EH, EA2)                       # common lane width of both slabs

    # 16-aligned row offsets (bf16 sublane tile) for each weight segment.
    o_wt = 0
    o_w1 = _round_up(o_wt + in_dim, 16)
    o_w2 = _round_up(o_w1 + T, 16)
    o_w3 = _round_up(o_w2 + EH, 16)
    rows = _round_up(o_w3 + EH, 16)

    slab = jnp.zeros((rows, W), jnp.float32)
    slab = slab.at[o_wt:o_wt + in_dim, 0:T].set(trunk_w)
    for e in range(E):
        slab = slab.at[o_w1:o_w1 + T, e * H:(e + 1) * H].set(params["w1"][e])
        slab = slab.at[o_w2 + e * H:o_w2 + (e + 1) * H,
                       e * H:(e + 1) * H].set(params["w2"][e])
        # merged layer 3: mean columns first, log_std columns second,
        # member-major within each half (row-major reshape == dim=1 stack).
        slab = slab.at[o_w3 + e * H:o_w3 + (e + 1) * H,
                       e * A:(e + 1) * A].set(params["w3"][e][:, :A])
        slab = slab.at[o_w3 + e * H:o_w3 + (e + 1) * H,
                       EA + e * A:EA + (e + 1) * A].set(params["w3"][e][:, A:])
    w_slab = slab.astype(jnp.bfloat16)

    # f32 vector slab: one row per bias / LayerNorm-affine vector.
    v = jnp.zeros((6, W), jnp.float32)
    v = v.at[0, 0:T].set(params["trunk_b"])
    v = v.at[1, 0:T].set(params["ln_g"])
    v = v.at[2, 0:T].set(params["ln_b"])
    v = v.at[3, 0:EH].set(params["b1"].reshape(EH))
    v = v.at[4, 0:EH].set(params["b2"].reshape(EH))
    v = v.at[5, 0:EA].set(params["b3"][:, :A].reshape(EA))
    v = v.at[5, EA:EA2].set(params["b3"][:, A:].reshape(EA))

    meta = dict(in_dim=in_dim, T=T, E=E, A=A, EH=EH, EA=EA, EA2=EA2,
                row_off=(o_wt, o_w1, o_w2, o_w3))
    return {"w": w_slab, "v": v, "meta": meta}


# ----------------------------- forward wrapper --------------------------------


def ensemble_gaussian_actor_forward(obs, w_slab, v_slab, *, meta):
    """Returns (mean, stddev) of the TruncatedNormal Pi, each [B, E, A]."""
    B = obs.shape[0]
    in_dim, T = meta["in_dim"], meta["T"]
    E, A, EH, EA, EA2 = meta["E"], meta["A"], meta["EH"], meta["EA"], meta["EA2"]

    kernel = functools.partial(_actor_kernel, in_dim=in_dim, T=T, EH=EH,
                               EA2=EA2, row_off=meta["row_off"])

    flops = 2 * B * (in_dim * T + T * EH + EH * EH + EH * EA2)
    transcendentals = B * (T + 2 * EA2)
    bytes_accessed = (4 * obs.size + 2 * w_slab.size + 4 * v_slab.size
                      + 4 * B * EA2)

    vmem = pl.BlockSpec(memory_space=pltpu.MemorySpace.VMEM)

    out = pl.pallas_call(
        kernel,
        in_specs=[vmem, vmem, vmem],
        out_specs=vmem,
        out_shape=jax.ShapeDtypeStruct((B, EA2), jnp.float32),
        cost_estimate=pl.CostEstimate(flops=flops,
                                      transcendentals=transcendentals,
                                      bytes_accessed=int(bytes_accessed)),
    )(obs, w_slab, v_slab)

    # Columns are member-major -> row-major reshape matches Utils.Ensemble's
    # dim=1 stack; no transpose, no data permutation.
    mean = out[:, :EA].reshape(B, E, A)
    stddev = out[:, EA:].reshape(B, E, A)
    # TODO(synk): TruncatedNormal(mean, stddev, low=-1, high=1) is a distribution
    # object (sampling / log_prob), not tensor compute; only its parameters are
    # computed here.  If a *sample* were needed, it could be fused in-kernel via
    # pltpu.prng_seed / pltpu.prng_random_bits to avoid another launch.
    return mean, stddev


# ----------------------------- reference (pure JAX, f32) -----------------------


def _reference(obs, p):
    y = obs @ p["trunk_w"] + p["trunk_b"]
    mu = y.mean(-1, keepdims=True)
    var = ((y - mu) ** 2).mean(-1, keepdims=True)
    h = jnp.tanh((y - mu) / jnp.sqrt(var + 1e-5) * p["ln_g"] + p["ln_b"])
    outs = []
    for e in range(p["w1"].shape[0]):
        z1 = jax.nn.relu(h @ p["w1"][e] + p["b1"][e])
        z2 = jax.nn.relu(z1 @ p["w2"][e] + p["b2"][e])
        outs.append(z2 @ p["w3"][e] + p["b3"][e])
    o = jnp.stack(outs, axis=1)                        # [B, E, 2A]
    mean_tanh, log_std = jnp.split(o, 2, axis=-1)
    return jnp.tanh(mean_tanh), jnp.exp(log_std)


# ----------------------------- main --------------------------------------------


if __name__ == "__main__":
    # Small shapes consistent with the module
    repr_shape = (4, 8, 8)            # in_dim = 256
    in_dim = 4 * 8 * 8
    trunk_dim = 32
    hidden_dim = 32
    action_dim = 6
    ensemble_size = 2
    batch = 2
    out_dim = action_dim * 2          # stddev_schedule is None

    key = jax.random.PRNGKey(0)
    ks = jax.random.split(key, 10)

    def init_w(k, shape, fan_in):
        return jax.random.normal(k, shape, jnp.float32) / jnp.sqrt(fan_in)

    params = {
        "trunk_w": init_w(ks[0], (in_dim, trunk_dim), in_dim),
        "trunk_b": jnp.zeros((trunk_dim,), jnp.float32),
        "ln_g": jnp.ones((trunk_dim,), jnp.float32),
        "ln_b": jnp.zeros((trunk_dim,), jnp.float32),
        "w1": init_w(ks[1], (ensemble_size, trunk_dim, hidden_dim), trunk_dim),
        "b1": 0.01 * jax.random.normal(ks[2], (ensemble_size, hidden_dim)),
        "w2": init_w(ks[3], (ensemble_size, hidden_dim, hidden_dim), hidden_dim),
        "b2": 0.01 * jax.random.normal(ks[4], (ensemble_size, hidden_dim)),
        "w3": init_w(ks[5], (ensemble_size, hidden_dim, out_dim), hidden_dim),
        "b3": 0.01 * jax.random.normal(ks[6], (ensemble_size, out_dim)),
    }

    obs = jax.random.normal(ks[7], (batch, in_dim), jnp.float32)

    # One-time weight re-layout (load-time in a real system).
    packed = pack_actor_params(params, ensemble_size=ensemble_size,
                               action_dim=action_dim)

    fwd = jax.jit(functools.partial(ensemble_gaussian_actor_forward,
                                    meta=packed["meta"]))
    mean, stddev = fwd(obs, packed["w"], packed["v"])
    jax.block_until_ready((mean, stddev))

    ref_mean, ref_std = _reference(obs, params)
    assert mean.shape == (batch, ensemble_size, action_dim)
    assert stddev.shape == (batch, ensemble_size, action_dim)
    # bf16 weights / bf16 MXU inputs with f32 accumulation -> loosened tolerance.
    assert jnp.allclose(mean, ref_mean, atol=3e-2, rtol=3e-2)
    assert jnp.allclose(stddev, ref_std, atol=3e-2, rtol=3e-2)

    print("KERNEL_OK")
</pallas_src>

<mosaic_0001>
module attributes {stable_mosaic.version = 11 : i64} {
  func.func @_actor_kernel(%arg0: memref<2x256xf32, #tpu.memory_space<vmem>>, %arg1: memref<416x64xbf16, #tpu.memory_space<vmem>>, %arg2: memref<6x64xf32, #tpu.memory_space<vmem>>, %arg3: memref<2x24xf32, #tpu.memory_space<vmem>>) attributes {dimension_semantics = [], scalar_prefetch = 0 : i64, scratch_operands = 0 : i64, tpu.core_type = #tpu.core_type<tc>} {
    %c0 = arith.constant 0 : index
    %c0_0 = arith.constant 0 : index
    %0 = vector.load %arg1[%c0, %c0_0] : memref<416x64xbf16, #tpu.memory_space<vmem>>, vector<256x32xbf16>
    %c256 = arith.constant 256 : index
    %c0_1 = arith.constant 0 : index
    %1 = vector.load %arg1[%c256, %c0_1] : memref<416x64xbf16, #tpu.memory_space<vmem>>, vector<32x64xbf16>
    %c288 = arith.constant 288 : index
    %c0_2 = arith.constant 0 : index
    %2 = vector.load %arg1[%c288, %c0_2] : memref<416x64xbf16, #tpu.memory_space<vmem>>, vector<64x64xbf16>
    %c352 = arith.constant 352 : index
    %c0_3 = arith.constant 0 : index
    %3 = vector.load %arg1[%c352, %c0_3] : memref<416x64xbf16, #tpu.memory_space<vmem>>, vector<64x24xbf16>
    %c0_4 = arith.constant 0 : index
    %c0_5 = arith.constant 0 : index
    %4 = vector.load %arg2[%c0_4, %c0_5] : memref<6x64xf32, #tpu.memory_space<vmem>>, vector<1x32xf32>
    %c1 = arith.constant 1 : index
    %c0_6 = arith.constant 0 : index
    %5 = vector.load %arg2[%c1, %c0_6] : memref<6x64xf32, #tpu.memory_space<vmem>>, vector<1x32xf32>
    %c2 = arith.constant 2 : index
    %c0_7 = arith.constant 0 : index
    %6 = vector.load %arg2[%c2, %c0_7] : memref<6x64xf32, #tpu.memory_space<vmem>>, vector<1x32xf32>
    %c3 = arith.constant 3 : index
    %c0_8 = arith.constant 0 : index
    %7 = vector.load %arg2[%c3, %c0_8] : memref<6x64xf32, #tpu.memory_space<vmem>>, vector<1x64xf32>
    %c4 = arith.constant 4 : index
    %c0_9 = arith.constant 0 : index
    %8 = vector.load %arg2[%c4, %c0_9] : memref<6x64xf32, #tpu.memory_space<vmem>>, vector<1x64xf32>
    %c5 = arith.constant 5 : index
    %c0_10 = arith.constant 0 : index
    %9 = vector.load %arg2[%c5, %c0_10] : memref<6x64xf32, #tpu.memory_space<vmem>>, vector<1x24xf32>
    %c0_11 = arith.constant 0 : index
    %c0_12 = arith.constant 0 : index
    %10 = vector.load %arg0[%c0_11, %c0_12] : memref<2x256xf32, #tpu.memory_space<vmem>>, vector<2x256xf32>
    %11 = arith.truncf %10 : vector<2x256xf32> to vector<2x256xbf16>
    %cst = arith.constant dense<0.000000e+00> : vector<2x32xf32>
    %12 = tpu.matmul %11, %0, %cst {dimension_numbers = #tpu.dot_dimension_numbers<[1], [0], [0], [1], [0, 0, 1, 1], [], []>} : vector<2x256xbf16>, vector<256x32xbf16>, vector<2x32xf32> -> vector<2x32xf32>
    %13 = vector.broadcast %4 : vector<1x32xf32> to vector<2x32xf32>
    %14 = arith.addf %12, %13 : vector<2x32xf32>
    %cst_13 = arith.constant dense<0.000000e+00> : vector<2xf32>
    %15 = vector.multi_reduction <add>, %14, %cst_13 [1] : vector<2x32xf32> to vector<2xf32>
    %16 = vector.shape_cast %15 : vector<2xf32> to vector<2x1xf32>
    %cst_14 = arith.constant 3.200000e+01 : f32
    %17 = vector.broadcast %cst_14 : f32 to vector<2x1xf32>
    %18 = arith.divf %16, %17 : vector<2x1xf32>
    %19 = vector.broadcast %18 : vector<2x1xf32> to vector<2x32xf32>
    %20 = arith.subf %14, %19 : vector<2x32xf32>
    %21 = arith.mulf %20, %20 : vector<2x32xf32>
    %cst_15 = arith.constant dense<0.000000e+00> : vector<2xf32>
    %22 = vector.multi_reduction <add>, %21, %cst_15 [1] : vector<2x32xf32> to vector<2xf32>
    %23 = vector.shape_cast %22 : vector<2xf32> to vector<2x1xf32>
    %cst_16 = arith.constant 3.200000e+01 : f32
    %24 = vector.broadcast %cst_16 : f32 to vector<2x1xf32>
    %25 = arith.divf %23, %24 : vector<2x1xf32>
    %26 = vector.broadcast %18 : vector<2x1xf32> to vector<2x32xf32>
    %27 = arith.subf %14, %26 : vector<2x32xf32>
    %cst_17 = arith.constant 9.99999974E-6 : f32
    %28 = vector.broadcast %cst_17 : f32 to vector<2x1xf32>
    %29 = arith.addf %25, %28 : vector<2x1xf32>
    %30 = math.rsqrt %29 : vector<2x1xf32>
    %31 = vector.broadcast %30 : vector<2x1xf32> to vector<2x32xf32>
    %32 = arith.mulf %27, %31 : vector<2x32xf32>
    %33 = vector.broadcast %5 : vector<1x32xf32> to vector<2x32xf32>
    %34 = arith.mulf %32, %33 : vector<2x32xf32>
    %35 = vector.broadcast %6 : vector<1x32xf32> to vector<2x32xf32>
    %36 = arith.addf %34, %35 : vector<2x32xf32>
    %37 = math.tanh %36 : vector<2x32xf32>
    %38 = arith.truncf %37 : vector<2x32xf32> to vector<2x32xbf16>
    %cst_18 = arith.constant dense<0.000000e+00> : vector<2x64xf32>
    %39 = tpu.matmul %38, %1, %cst_18 {dimension_numbers = #tpu.dot_dimension_numbers<[1], [0], [0], [1], [0, 0, 1, 1], [], []>} : vector<2x32xbf16>, vector<32x64xbf16>, vector<2x64xf32> -> vector<2x64xf32>
    %40 = vector.broadcast %7 : vector<1x64xf32> to vector<2x64xf32>
    %41 = arith.addf %39, %40 : vector<2x64xf32>
    %cst_19 = arith.constant 0.000000e+00 : f32
    %42 = vector.broadcast %cst_19 : f32 to vector<2x64xf32>
    %43 = arith.maximumf %41, %42 : vector<2x64xf32>
    %44 = arith.truncf %43 : vector<2x64xf32> to vector<2x64xbf16>
    %cst_20 = arith.constant dense<0.000000e+00> : vector<2x64xf32>
    %45 = tpu.matmul %44, %2, %cst_20 {dimension_numbers = #tpu.dot_dimension_numbers<[1], [0], [0], [1], [0, 0, 1, 1], [], []>} : vector<2x64xbf16>, vector<64x64xbf16>, vector<2x64xf32> -> vector<2x64xf32>
    %46 = vector.broadcast %8 : vector<1x64xf32> to vector<2x64xf32>
    %47 = arith.addf %45, %46 : vector<2x64xf32>
    %cst_21 = arith.constant 0.000000e+00 : f32
    %48 = vector.broadcast %cst_21 : f32 to vector<2x64xf32>
    %49 = arith.maximumf %47, %48 : vector<2x64xf32>
    %50 = arith.truncf %49 : vector<2x64xf32> to vector<2x64xbf16>
    %cst_22 = arith.constant dense<0.000000e+00> : vector<2x24xf32>
    %51 = tpu.matmul %50, %3, %cst_22 {dimension_numbers = #tpu.dot_dimension_numbers<[1], [0], [0], [1], [0, 0, 1, 1], [], []>} : vector<2x64xbf16>, vector<64x24xbf16>, vector<2x24xf32> -> vector<2x24xf32>
    %52 = vector.broadcast %9 : vector<1x24xf32> to vector<2x24xf32>
    %53 = arith.addf %51, %52 : vector<2x24xf32>
    %54 = tpu.iota {dimensions = array<i32: 1>} : vector<2x24xi32>
    %c12_i32 = arith.constant 12 : i32
    %55 = vector.broadcast %c12_i32 : i32 to vector<2x24xi32>
    %56 = arith.cmpi slt, %54, %55 : vector<2x24xi32>
    %57 = math.tanh %53 : vector<2x24xf32>
    %58 = math.exp %53 : vector<2x24xf32>
    %59 = arith.select %56, %57, %58 : vector<2x24xi1>, vector<2x24xf32>
    %c0_23 = arith.constant 0 : index
    %c0_24 = arith.constant 0 : index
    %60 = vector.load %arg3[%c0_23, %c0_24] : memref<2x24xf32, #tpu.memory_space<vmem>>, vector<2x24xf32>
    tpu.vector_store %arg3[%c0_23, %c0_24], %59 {strides = array<i32>} : memref<2x24xf32, #tpu.memory_space<vmem>>, vector<2x24xf32>,
    return
  }
}

</mosaic_0001>

<llo_original>
// kernel: ensemble_gaussian_actor_forward.1
$region0: #{ensemble_gaussian_actor_forward.1}
  #allocation0 [shape = 'u32[]', space=smem, size = 0x4, offset = 0x4, fixed_abs, tag = 'smem constant byte address 0x4 - core index']
  #allocation1 [shape = 'u32[72,128]{1,0:T(1,128)}', space=vmem, size = 0x9000, scoped, tag = 'internal scratch']
  %s0 = inlined_call_operand.vmem [shape: f32[2,256], index: 0, kind: input, shape index: {}]
  %s1 = inlined_call_operand.vmem [shape: bf16[416,64], index: 1, kind: input, shape index: {}]
  %s2 = inlined_call_operand.vmem [shape: f32[6,64], index: 2, kind: input, shape index: {}]
  %s3 = inlined_call_operand.vmem [shape: f32[2,24], index: 3, kind: output, shape index: {}]
  %s4 = sld [smem:[#allocation0]]
  $region22: #{ensemble_gaussian_actor_forward.1} parent=0
    _
  %s6 = ssub.s32 1, %s4
  %s7 = scalar_select 0, %s6, %s4
  // Predicated region
  $region2: #{ensemble_gaussian_actor_forward.1} parent=0 // pred_check
    _
  $region3: #{ensemble_gaussian_actor_forward.1} parent=0 // pred_check_branch
    %9 = sbr.rel (0) target = $region5
  $region4: #{ensemble_gaussian_actor_forward.1} parent=0 // pred_region
    _
  $region5: #{ensemble_gaussian_actor_forward.1} parent=0 // pred_fallthru
    _
  // Predicated region
  $region6: #{ensemble_gaussian_actor_forward.1} parent=0 // pred_check
    _
  $region7: #{ensemble_gaussian_actor_forward.1} parent=0 // pred_check_branch
    %11 = sbr.rel (0) target = $region9
  $region8: #{ensemble_gaussian_actor_forward.1} parent=0 // pred_region
    _
  $region9: #{ensemble_gaussian_actor_forward.1} parent=0 // pred_fallthru
    _
  // Predicated region
  $region10: #{ensemble_gaussian_actor_forward.1} parent=0 // pred_check
    _
  $region11: #{ensemble_gaussian_actor_forward.1} parent=0 // pred_check_branch
    %13 = sbr.rel (0) target = $region13
  $region12: #{ensemble_gaussian_actor_forward.1} parent=0 // pred_region
    _
  $region13: #{ensemble_gaussian_actor_forward.1} parent=0 // pred_fallthru
    _
  %v15 = vld [vmem:[%s1] sm:$0xf]
  %v16 = vld [vmem:[%s1 + $0x4] sm:$0xf]
  %v17 = vld [vmem:[%s1 + $0x8] sm:$0xf]
  %v18 = vld [vmem:[%s1 + $0xc] sm:$0xf]
  %v19 = vld [vmem:[%s1 + $0x10] sm:$0xf]
  %v20 = vld [vmem:[%s1 + $0x14] sm:$0xf]
  %v21 = vld [vmem:[%s1 + $0x18] sm:$0xf]
  %v22 = vld [vmem:[%s1 + $0x1c] sm:$0xf]
  %v23 = vld [vmem:[%s1 + $0x20] sm:$0xf]
  %v24 = vld [vmem:[%s1 + $0x24] sm:$0xf]
  %v25 = vld [vmem:[%s1 + $0x28] sm:$0xf]
  %v26 = vld [vmem:[%s1 + $0x2c] sm:$0xf]
  %v27 = vld [vmem:[%s1 + $0x30] sm:$0xf]
  %v28 = vld [vmem:[%s1 + $0x34] sm:$0xf]
  %v29 = vld [vmem:[%s1 + $0x38] sm:$0xf]
  %v30 = vld [vmem:[%s1 + $0x3c] sm:$0xf]
  %v31 = vld [vmem:[%s1 + $0x40] sm:$0xf]
  %v32 = vld [vmem:[%s1 + $0x44] sm:$0xf]
  %v33 = vld [vmem:[%s1 + $0x48] sm:$0xf]
  %v34 = vld [vmem:[%s1 + $0x4c] sm:$0xf]
  %v35 = vld [vmem:[%s1 + $0x50] sm:$0xf]
  %v36 = vld [vmem:[%s1 + $0x54] sm:$0xf]
  %v37 = vld [vmem:[%s1 + $0x58] sm:$0xf]
  %v38 = vld [vmem:[%s1 + $0x5c] sm:$0xf]
  %v39 = vld [vmem:[%s1 + $0x60] sm:$0xf]
  %v40 = vld [vmem:[%s1 + $0x64] sm:$0xf]
  %v41 = vld [vmem:[%s1 + $0x68] sm:$0xf]
  %v42 = vld [vmem:[%s1 + $0x6c] sm:$0xf]
  %v43 = vld [vmem:[%s1 + $0x70] sm:$0xf]
  %v44 = vld [vmem:[%s1 + $0x74] sm:$0xf]
  %v45 = vld [vmem:[%s1 + $0x78] sm:$0xf]
  %v46 = vld [vmem:[%s1 + $0x7c] sm:$0xf]
  %v47 = vld [vmem:[%s1 + $0x80] sm:$0xf]
  %v48 = vld [vmem:[%s1 + $0x84] sm:$0xf]
  %v49 = vld [vmem:[%s1 + $0x88] sm:$0xf]
  %v50 = vld [vmem:[%s1 + $0x8c] sm:$0xf]
  %v51 = vld [vmem:[%s1 + $0x90] sm:$0xf]
  %v52 = vld [vmem:[%s1 + $0x94] sm:$0xf]
  %v53 = vld [vmem:[%s1 + $0x98] sm:$0xf]
  %v54 = vld [vmem:[%s1 + $0x9c] sm:$0xf]
  %v55 = vld [vmem:[%s1 + $0xa0] sm:$0xf]
  %v56 = vld [vmem:[%s1 + $0xa4] sm:$0xf]
  %v57 = vld [vmem:[%s1 + $0xa8] sm:$0xf]
  %v58 = vld [vmem:[%s1 + $0xac] sm:$0xf]
  %v59 = vld [vmem:[%s1 + $0xb0] sm:$0xf]
  %v60 = vld [vmem:[%s1 + $0xb4] sm:$0xf]
  %v61 = vld [vmem:[%s1 + $0xb8] sm:$0xf]
  %v62 = vld [vmem:[%s1 + $0xbc] sm:$0xf]
  %v63 = vld [vmem:[%s1 + $0xc0] sm:$0xf]
  %v64 = vld [vmem:[%s1 + $0xc4] sm:$0xf]
  %v65 = vld [vmem:[%s1 + $0xc8] sm:$0xf]
  %v66 = vld [vmem:[%s1 + $0xcc] sm:$0xf]
  %v67 = vld [vmem:[%s2] sm:$0x1]
  %v68 = vld [vmem:[%s2 + $0x1] sm:$0x1]
  %v69 = vld [vmem:[%s2 + $0x2] sm:$0x1]
  %v70 = vld [vmem:[%s2 + $0x3] sm:$0x1]
  %v71 = vld [vmem:[%s2 + $0x4] sm:$0x1]
  %v72 = vld [vmem:[%s2 + $0x5] sm:$0x1]
  %v73 = vld [vmem:[%s0] sm:$0xf]
  %75 = vst [vmem:[#allocation1] ss:$4 sm:$0xff] %v73
  %v76 = vld.sshfl [vmem:[#allocation1] sm:$0xff pattern:$0x73625140]
  %v77 = vld.sshfl [vmem:[#allocation1 + $0x8] sm:$0xff pattern:$0x73625140]
  %v80 = vpack.c.bf16 %v76, %v76
  %v81 = vpack.c.bf16 %v77, %v77
  %v82 = vperm.slane %v67, 0
  %v115 = vunpack.c.l.b16 %v15
  %v116 = vunpack.c.l.b16 %v16
  %v117 = vunpack.c.l.b16 %v17
  %v118 = vunpack.c.l.b16 %v18
  %v119 = vunpack.c.l.b16 %v19
  %v120 = vunpack.c.l.b16 %v20
  %v121 = vunpack.c.l.b16 %v21
  %v122 = vunpack.c.l.b16 %v22
  %v123 = vunpack.c.l.b16 %v23
  %v124 = vunpack.c.l.b16 %v24
  %v125 = vunpack.c.l.b16 %v25
  %v126 = vunpack.c.l.b16 %v26
  %v127 = vunpack.c.l.b16 %v27
  %v128 = vunpack.c.l.b16 %v28
  %v129 = vunpack.c.l.b16 %v29
  %v130 = vunpack.c.l.b16 %v30
  %v131 = vunpack.c.l.b16 %v31
  %v132 = vunpack.c.l.b16 %v32
  %v133 = vunpack.c.l.b16 %v33
  %v134 = vunpack.c.l.b16 %v34
  %v135 = vunpack.c.l.b16 %v35
  %v136 = vunpack.c.l.b16 %v36
  %v137 = vunpack.c.l.b16 %v37
  %v138 = vunpack.c.l.b16 %v38
  %v139 = vunpack.c.l.b16 %v39
  %v140 = vunpack.c.l.b16 %v40
  %v141 = vunpack.c.l.b16 %v41
  %v142 = vunpack.c.l.b16 %v42
  %v143 = vunpack.c.l.b16 %v43
  %v144 = vunpack.c.l.b16 %v44
  %v145 = vunpack.c.l.b16 %v45
  %v146 = vunpack.c.l.b16 %v46
  %v147 = vpack.c.b16 %v116, %v115
  %v148 = vpack.c.b16 %v118, %v117
  %v149 = vpack.c.b16 %v120, %v119
  %v150 = vpack.c.b16 %v122, %v121
  %v151 = vpack.c.b16 %v124, %v123
  %v152 = vpack.c.b16 %v126, %v125
  %v153 = vpack.c.b16 %v128, %v127
  %v154 = vpack.c.b16 %v130, %v129
  %v155 = vpack.c.b16 %v132, %v131
  %v156 = vpack.c.b16 %v134, %v133
  %v157 = vpack.c.b16 %v136, %v135
  %v158 = vpack.c.b16 %v138, %v137
  %v159 = vpack.c.b16 %v140, %v139
  %v160 = vpack.c.b16 %v142, %v141
  %v161 = vpack.c.b16 %v144, %v143
  %v162 = vpack.c.b16 %v146, %v145
  %179 = vmatpush.bf16.msra.mxu0 %v154
  %180 = vmatpush.bf16.msra.mxu0 %v153
  %181 = vmatpush.bf16.msra.mxu0 %v152
  %182 = vmatpush.bf16.msra.mxu0 %v151
  %183 = vmatpush.bf16.msra.mxu0 %v150
  %184 = vmatpush.bf16.msra.mxu0 %v149
  %185 = vmatpush.bf16.msra.mxu0 %v148
  %186 = vmatpush.bf16.msra.mxu0 %v147
  %187 = vmatmul.bf16.gmra.mxu0 %v80
  %v188 = vpop.f32.mrf.mxu0
  %v189 = vadd.f32 %v82, %v188
  %v190 = vpop.f32.mrf.mxu0
  %191 = vdwg.mxu0
  %192 = vmatpush.bf16.msra.mxu0 %v162
  %193 = vmatpush.bf16.msra.mxu0 %v161
  %194 = vmatpush.bf16.msra.mxu0 %v160
  %195 = vmatpush.bf16.msra.mxu0 %v159
  %196 = vmatpush.bf16.msra.mxu0 %v158
  %197 = vmatpush.bf16.msra.mxu0 %v157
  %198 = vmatpush.bf16.msra.mxu0 %v156
  %199 = vmatpush.bf16.msra.mxu0 %v155
  %200 = vmatmul.bf16.gmra.mxu0 %v81
  %v201 = vpop.f32.mrf.mxu0
  %v202 = vadd.f32 %v189, %v201
  %v203 = vpop.f32.mrf.mxu0
  %204 = vdwg.mxu0
  %vm205 = vcmask 254976
  %v206 = vsel %vm205, %v202, 0.0
  %207 = vadd.xlane.f32.xlu0 %v206
  %v208 = vpop.xlane.xlu0 %207
  %v209 = vrcp.pop 32.0
  %v210 = vmul.f32 32.0, %v209
  %v211 = vsub.f32 1.0, %v210
  %v212 = vmul.f32 %v209, %v211
  %v213 = vadd.f32 %v209, %v212
  %vm214 = vweird.f32 %v209
  %v215 = vsel %vm214, %v209, %v213
  %v216 = vmul.f32 %v208, %v215
  %v217 = vsub.f32 %v202, %v216
  %v218 = vmul.f32 %v217, %v217
  %v219 = vsel %vm205, %v218, 0.0
  %220 = vadd.xlane.f32.xlu0 %v219
  %v221 = vpop.xlane.xlu0 %220
  %v222 = vmul.f32 %v221, %v215
  %v223 = vadd.f32 %v222, 1e-05
  %v224 = vrsqrt.pop %v223
  %v225 = vmul.f32 %v224, %v223
  %v226 = vmul.f32 %v225, %v224
  %v227 = vmul.f32 0.5, %v226
  %v228 = vsub.f32 1.5, %v227
  %v229 = vmul.f32 %v224, %v228
  %vm230 = vweird.f32 %v223
  %vm231 = vweird.f32 %v224
  %vm232 = vmor %vm230, %vm231
  %v233 = vsel %vm232, %v224, %v229
  %v234 = vmul.f32 %v217, %v233
  %v235 = vperm.slane %v68, 0
  %v236 = vmul.f32 %v234, %v235
  %v237 = vperm.slane %v69, 0
  %v238 = vadd.f32 %v236, %v237
  %v239 = vtanh.pop %v238
  %v240 = vpack.c.bf16 %v239, %v239
  %v241 = vperm.slane %v70, 0
  %v246 = vunpack.c.l.b16 %v47
  %v247 = vunpack.c.l.b16 %v48
  %v248 = vunpack.c.l.b16 %v49
  %v249 = vunpack.c.l.b16 %v50
  %v250 = vpack.c.b16 %v247, %v246
  %v251 = vpack.c.b16 %v249, %v248
  %vm254 = vcmask 261120
  %v256 = vsel %vm254, %v240, 0
  %258 = vmatpush.bf16.msra.mxu0 0
  %259 = vmatpush.bf16.msra.mxu0 0
  %260 = vmatpush.bf16.msra.mxu0 0
  %261 = vmatpush.bf16.msra.mxu0 0
  %262 = vmatpush.bf16.msra.mxu0 0
  %263 = vmatpush.bf16.msra.mxu0 0
  %264 = vmatpush.bf16.msra.mxu0 %v251
  %265 = vmatpush.bf16.msra.mxu0 %v250
  %266 = vmatmul.bf16.gmra.mxu0 %v256
  %v267 = vpop.f32.mrf.mxu0
  %v268 = vadd.f32 %v241, %v267
  %v269 = vpop.f32.mrf.mxu0
  %270 = vdwg.mxu0
  %v271 = vmax.f32 %v268, 0.0
  %v272 = vpack.c.bf16 %v271, %v271
  %v273 = vperm.slane %v71, 0
  %v282 = vunpack.c.l.b16 %v51
  %v283 = vunpack.c.l.b16 %v52
  %v284 = vunpack.c.l.b16 %v53
  %v285 = vunpack.c.l.b16 %v54
  %v286 = vunpack.c.l.b16 %v55
  %v287 = vunpack.c.l.b16 %v56
  %v288 = vunpack.c.l.b16 %v57
  %v289 = vunpack.c.l.b16 %v58
  %v290 = vpack.c.b16 %v283, %v282
  %v291 = vpack.c.b16 %v285, %v284
  %v292 = vpack.c.b16 %v287, %v286
  %v293 = vpack.c.b16 %v289, %v288
  %vm298 = vcmask 523264
  %v300 = vsel %vm298, %v272, 0
  %302 = vmatpush.bf16.msra.mxu0 0
  %303 = vmatpush.bf16.msra.mxu0 0
  %304 = vmatpush.bf16.msra.mxu0 0
  %305 = vmatpush.bf16.msra.mxu0 0
  %306 = vmatpush.bf16.msra.mxu0 %v293
  %307 = vmatpush.bf16.msra.mxu0 %v292
  %308 = vmatpush.bf16.msra.mxu0 %v291
  %309 = vmatpush.bf16.msra.mxu0 %v290
  %310 = vmatmul.bf16.gmra.mxu0 %v300
  %v311 = vpop.f32.mrf.mxu0
  %v312 = vadd.f32 %v273, %v311
  %v313 = vpop.f32.mrf.mxu0
  %314 = vdwg.mxu0
  %v315 = vmax.f32 %v312, 0.0
  %v316 = vpack.c.bf16 %v315, %v315
  %v317 = vperm.slane %v72, 0
  %v326 = vunpack.c.l.b16 %v59
  %v327 = vunpack.c.l.b16 %v60
  %v328 = vunpack.c.l.b16 %v61
  %v329 = vunpack.c.l.b16 %v62
  %v330 = vunpack.c.l.b16 %v63
  %v331 = vunpack.c.l.b16 %v64
  %v332 = vunpack.c.l.b16 %v65
  %v333 = vunpack.c.l.b16 %v66
  %v334 = vpack.c.b16 %v327, %v326
  %v335 = vpack.c.b16 %v329, %v328
  %v336 = vpack.c.b16 %v331, %v330
  %v337 = vpack.c.b16 %v333, %v332
  %v343 = vsel %vm298, %v316, 0
  %345 = vmatpush.bf16.msra.mxu0 0
  %346 = vmatpush.bf16.msra.mxu0 0
  %347 = vmatpush.bf16.msra.mxu0 0
  %348 = vmatpush.bf16.msra.mxu0 0
  %349 = vmatpush.bf16.msra.mxu0 %v337
  %350 = vmatpush.bf16.msra.mxu0 %v336
  %351 = vmatpush.bf16.msra.mxu0 %v335
  %352 = vmatpush.bf16.msra.mxu0 %v334
  %353 = vmatmul.bf16.gmra.mxu0 %v343
  %v354 = vpop.f32.mrf.mxu0
  %v355 = vadd.f32 %v317, %v354
  %v356 = vpop.f32.mrf.mxu0
  %357 = vdwg.mxu0
  %v358 = vlaneseq
  %v359 = vand.u32 %v358, 127
  %vm360 = vcmp.lt.s32.totalorder %v359, 12
  %v361 = vtanh.pop %v355
  %v362 = vmul.f32 %v355, 1.442695
  %v363 = vpow.pop %v362
  %v364 = vsel %vm360, %v361, %v363
  %vm365 = vcmask 189440
  %366 = vst.msk [vmem:[%s3] sm:$0x3] %vm365, %v364
  // Predicated region
  $region14: #{ensemble_gaussian_actor_forward.1} parent=0 // pred_check
    _
  $region15: #{ensemble_gaussian_actor_forward.1} parent=0 // pred_check_branch
    %368 = sbr.rel (0) target = $region17
  $region16: #{ensemble_gaussian_actor_forward.1} parent=0 // pred_region
    _
  $region17: #{ensemble_gaussian_actor_forward.1} parent=0 // pred_fallthru
    _
  // Predicated region
  $region18: #{ensemble_gaussian_actor_forward.1} parent=0 // pred_check
    _
  $region19: #{ensemble_gaussian_actor_forward.1} parent=0 // pred_check_branch
    %370 = sbr.rel (0) target = $region21
  $region20: #{ensemble_gaussian_actor_forward.1} parent=0 // pred_region
    _
  $region21: #{ensemble_gaussian_actor_forward.1} parent=0 // pred_fallthru
    _

</llo_original>
